<compile_context>
chip_gen: v7x
topology: tpu7x:2x2x1
jax: 0.10.0
libtpu: 0.0.40
codegen_flags: <defaults>
</compile_context>

<pallas_src>
import jax
import jax.numpy as jnp
from jax.experimental import pallas as pl
from jax.experimental.pallas import tpu as pltpu


def _round_up(x, m):
    return (x + m - 1) // m * m


def _pick_batch_tile(bp):
    # bp is a multiple of 8; choose the largest convenient divisor <= 512.
    for tb in (512, 256, 128, 64, 32, 16, 8):
        if bp % tb == 0:
            return tb
    return bp


def rnn_agent_kernel(
    x_ref,      # (tb, In)
    h_ref,      # (tb, Hp)      pad lanes are zero
    w1_ref,     # (In, Hp)
    b1_ref,     # (1, Hp)
    wih_ref,    # (Hp, 3*Hp)    gates [r, z, n], each block Hp lanes wide
    gbias_ref,  # (1, 3*Hp)     [b_ir + b_hr, b_iz + b_hz, b_in]
    whh_ref,    # (Hp, 3*Hp)
    bhn_ref,    # (1, Hp)       b_hn (kept separate: lives inside r * (...))
    w2_ref,     # (Hp, OutP)
    b2_ref,     # (1, OutP)
    out_ref,    # (tb, OutP)
    hout_ref,   # (tb, Hp)
):
    Hp = h_ref.shape[-1]
    x = x_ref[...]
    h = h_ref[...]

    # fc1 + ReLU (output padded to Hp lanes -> dense vregs, unmasked stores).
    x1 = jnp.dot(x, w1_ref[...], preferred_element_type=jnp.float32) + b1_ref[...]
    x1 = jnp.maximum(x1, 0.0)

    # GRUCell (PyTorch semantics) with gate matmuls fused: 2 dots instead of 6.
    gi = jnp.dot(x1, wih_ref[...], preferred_element_type=jnp.float32) + gbias_ref[...]
    gh = jnp.dot(h, whh_ref[...], preferred_element_type=jnp.float32)

    # 128-aligned lane slices: no cross-lane data movement.
    r = jax.nn.sigmoid(gi[:, 0 * Hp:1 * Hp] + gh[:, 0 * Hp:1 * Hp])
    z = jax.nn.sigmoid(gi[:, 1 * Hp:2 * Hp] + gh[:, 1 * Hp:2 * Hp])
    n = jnp.tanh(gi[:, 2 * Hp:3 * Hp] + r * (gh[:, 2 * Hp:3 * Hp] + bhn_ref[...]))
    h_out = (1.0 - z) * n + z * h            # pad lanes stay exactly 0

    # fc2
    out = jnp.dot(h_out, w2_ref[...], preferred_element_type=jnp.float32) + b2_ref[...]

    out_ref[...] = out.astype(out_ref.dtype)
    hout_ref[...] = h_out.astype(hout_ref.dtype)


def pack_params(params):
    """Pack/pad logical params into the lane-dense kernel layout (do this once)."""
    (w1, b1, wih, bih, whh, bhh, w2, b2) = params
    In, H = w1.shape
    Out = w2.shape[1]
    Hp = _round_up(H, 128)
    OutP = _round_up(Out, 128)

    def pad2(a, rows, cols):
        return jnp.pad(a, ((0, rows - a.shape[0]), (0, cols - a.shape[1])))

    def pad1(v, n):
        return jnp.pad(v, (0, n - v.shape[0]))

    w1_p = pad2(w1, In, Hp)                             # (In, Hp)
    b1_p = pad1(b1, Hp).reshape(1, Hp)                  # (1, Hp)

    def pack_gates(w):                                  # (3, H, H) -> (Hp, 3*Hp)
        return jnp.concatenate([pad2(w[g], Hp, Hp) for g in range(3)], axis=1)

    wih_p = pack_gates(wih)
    whh_p = pack_gates(whh)

    gate_bias = jnp.concatenate([
        pad1(bih[0] + bhh[0], Hp),                      # folded r bias
        pad1(bih[1] + bhh[1], Hp),                      # folded z bias
        pad1(bih[2], Hp),                               # b_in
    ]).reshape(1, 3 * Hp)
    bhn = pad1(bhh[2], Hp).reshape(1, Hp)               # b_hn

    w2_p = pad2(w2, Hp, OutP)                           # (Hp, OutP)
    b2_p = pad1(b2, OutP).reshape(1, OutP)              # (1, OutP)

    packed = (w1_p, b1_p, wih_p, gate_bias, whh_p, bhn, w2_p, b2_p)
    meta = dict(In=In, H=H, Hp=Hp, Out=Out, OutP=OutP)
    return packed, meta


def rnn_agent_forward(inputs, hidden_state, packed_params, meta):
    """inputs: (B, In) f32; hidden_state: (..., H) f32 with leading dims collapsing to B."""
    In, H, Hp, Out, OutP = meta["In"], meta["H"], meta["Hp"], meta["Out"], meta["OutP"]
    B = inputs.shape[0]
    h_in = hidden_state.reshape(-1, H)
    assert h_in.shape[0] == B, "hidden_state batch must match inputs batch"

    # Pad batch to a sublane multiple and the hidden lanes to Hp (pad = zeros).
    Bp = _round_up(B, 8)
    tb = _pick_batch_tile(Bp)
    x_p = jnp.pad(inputs.astype(jnp.float32), ((0, Bp - B), (0, 0)))
    h_p = jnp.pad(h_in.astype(jnp.float32), ((0, Bp - B), (0, Hp - H)))

    row_spec = lambda shape: pl.BlockSpec(shape, lambda i: (i, 0))   # tiled over batch
    full_spec = lambda shape: pl.BlockSpec(shape, lambda i: (0, 0))  # resident weights

    (w1_p, b1_p, wih_p, gbias, whh_p, bhn, w2_p, b2_p) = packed_params

    out_p, hout_p = pl.pallas_call(
        rnn_agent_kernel,
        out_shape=(
            jax.ShapeDtypeStruct((Bp, OutP), jnp.float32),
            jax.ShapeDtypeStruct((Bp, Hp), jnp.float32),
        ),
        grid=(Bp // tb,),
        in_specs=[
            row_spec((tb, In)),            # x
            row_spec((tb, Hp)),            # h
            full_spec((In, Hp)),           # w1
            full_spec((1, Hp)),            # b1
            full_spec((Hp, 3 * Hp)),       # wih packed
            full_spec((1, 3 * Hp)),        # folded gate bias
            full_spec((Hp, 3 * Hp)),       # whh packed
            full_spec((1, Hp)),            # b_hn
            full_spec((Hp, OutP)),         # w2
            full_spec((1, OutP)),          # b2
        ],
        out_specs=(
            row_spec((tb, OutP)),
            row_spec((tb, Hp)),
        ),
        compiler_params=pltpu.CompilerParams(
            dimension_semantics=("parallel",),   # v7x: split batch tiles across TCs
        ),
    )(x_p, h_p, w1_p, b1_p, wih_p, gbias, whh_p, bhn, w2_p, b2_p)

    return out_p[:B, :Out], hout_p[:B, :H]


def init_params(key, input_shape, hidden_dim, output_shape):
    """Deterministic synthetic parameters with PyTorch-equivalent shapes,
    pre-transposed to (in, out); GRU gates stacked as (3, in, H) in [r, z, n] order."""
    ks = jax.random.split(key, 8)
    s = 0.1
    w1 = jax.random.normal(ks[0], (input_shape, hidden_dim), jnp.float32) * s
    b1 = jax.random.normal(ks[1], (hidden_dim,), jnp.float32) * s
    wih = jax.random.normal(ks[2], (3, hidden_dim, hidden_dim), jnp.float32) * s
    bih = jax.random.normal(ks[3], (3, hidden_dim), jnp.float32) * s
    whh = jax.random.normal(ks[4], (3, hidden_dim, hidden_dim), jnp.float32) * s
    bhh = jax.random.normal(ks[5], (3, hidden_dim), jnp.float32) * s
    w2 = jax.random.normal(ks[6], (hidden_dim, output_shape), jnp.float32) * s
    b2 = jax.random.normal(ks[7], (output_shape,), jnp.float32) * s
    return (w1, b1, wih, bih, whh, bhh, w2, b2)


def reference_forward(inputs, hidden_state, params):
    """Pure-JAX reference mirroring torch fc1/GRUCell/fc2 semantics."""
    (w1, b1, wih, bih, whh, bhh, w2, b2) = params
    H = w1.shape[1]
    x1 = jnp.maximum(inputs @ w1 + b1, 0.0)
    h = hidden_state.reshape(-1, H)
    gi = jnp.stack([x1 @ wih[g] + bih[g] for g in range(3)])
    gh = jnp.stack([h @ whh[g] + bhh[g] for g in range(3)])
    r = jax.nn.sigmoid(gi[0] + gh[0])
    z = jax.nn.sigmoid(gi[1] + gh[1])
    n = jnp.tanh(gi[2] + r * gh[2])
    h_out = (1.0 - z) * n + z * h
    return h_out @ w2 + b2, h_out


if __name__ == "__main__":
    B = 8
    INPUT_SHAPE = 32
    HIDDEN = 32
    OUTPUT_SHAPE = 16

    key = jax.random.PRNGKey(0)
    kx, kh, kp = jax.random.split(key, 3)
    x = jax.random.normal(kx, (B, INPUT_SHAPE), jnp.float32)
    h0 = jax.random.normal(kh, (B, HIDDEN), jnp.float32)
    params = init_params(kp, INPUT_SHAPE, HIDDEN, OUTPUT_SHAPE)

    packed, meta = pack_params(params)   # one-time weight packing / lane padding

    out, h_out = rnn_agent_forward(x, h0, packed, meta)
    out = jax.block_until_ready(out)
    h_out = jax.block_until_ready(h_out)

    ref_out, ref_h = reference_forward(x, h0, params)
    assert out.shape == (B, OUTPUT_SHAPE) and h_out.shape == (B, HIDDEN)
    assert jnp.allclose(out, ref_out, atol=1e-4, rtol=1e-4)
    assert jnp.allclose(h_out, ref_h, atol=1e-4, rtol=1e-4)

    print("KERNEL_OK")
</pallas_src>

<mosaic_0001>
module attributes {stable_mosaic.version = 11 : i64} {
  func.func @rnn_agent_kernel(%arg0: i32, %arg1: memref<8x32xf32, #tpu.memory_space<vmem>>, %arg2: memref<8x128xf32, #tpu.memory_space<vmem>>, %arg3: memref<32x128xf32, #tpu.memory_space<vmem>>, %arg4: memref<1x128xf32, #tpu.memory_space<vmem>>, %arg5: memref<128x384xf32, #tpu.memory_space<vmem>>, %arg6: memref<1x384xf32, #tpu.memory_space<vmem>>, %arg7: memref<128x384xf32, #tpu.memory_space<vmem>>, %arg8: memref<1x128xf32, #tpu.memory_space<vmem>>, %arg9: memref<128x128xf32, #tpu.memory_space<vmem>>, %arg10: memref<1x128xf32, #tpu.memory_space<vmem>>, %arg11: memref<8x128xf32, #tpu.memory_space<vmem>>, %arg12: memref<8x128xf32, #tpu.memory_space<vmem>>) attributes {dimension_semantics = [#tpu.dimension_semantics<parallel>], iteration_bounds = array<i64: 1>, scalar_prefetch = 0 : i64, scratch_operands = 0 : i64, tpu.core_type = #tpu.core_type<tc>, window_params = [{transform_indices = @transform_0, window_bounds = array<i64: 8, 32>}, {transform_indices = @transform_1, window_bounds = array<i64: 8, 128>}, {pipeline_mode = #tpu.pipeline_mode<synchronous>, transform_indices = @transform_2, window_bounds = array<i64: 32, 128>}, {pipeline_mode = #tpu.pipeline_mode<synchronous>, transform_indices = @transform_3, window_bounds = array<i64: 1, 128>}, {pipeline_mode = #tpu.pipeline_mode<synchronous>, transform_indices = @transform_4, window_bounds = array<i64: 128, 384>}, {pipeline_mode = #tpu.pipeline_mode<synchronous>, transform_indices = @transform_5, window_bounds = array<i64: 1, 384>}, {pipeline_mode = #tpu.pipeline_mode<synchronous>, transform_indices = @transform_6, window_bounds = array<i64: 128, 384>}, {pipeline_mode = #tpu.pipeline_mode<synchronous>, transform_indices = @transform_7, window_bounds = array<i64: 1, 128>}, {pipeline_mode = #tpu.pipeline_mode<synchronous>, transform_indices = @transform_8, window_bounds = array<i64: 128, 128>}, {pipeline_mode = #tpu.pipeline_mode<synchronous>, transform_indices = @transform_9, window_bounds = array<i64: 1, 128>}, {transform_indices = @transform_10, window_bounds = array<i64: 8, 128>}, {transform_indices = @transform_11, window_bounds = array<i64: 8, 128>}]} {
    %c0 = arith.constant 0 : index
    %c0_0 = arith.constant 0 : index
    %0 = vector.load %arg1[%c0, %c0_0] : memref<8x32xf32, #tpu.memory_space<vmem>>, vector<8x32xf32>
    %c0_1 = arith.constant 0 : index
    %c0_2 = arith.constant 0 : index
    %1 = vector.load %arg2[%c0_1, %c0_2] : memref<8x128xf32, #tpu.memory_space<vmem>>, vector<8x128xf32>
    %c0_3 = arith.constant 0 : index
    %c0_4 = arith.constant 0 : index
    %2 = vector.load %arg3[%c0_3, %c0_4] : memref<32x128xf32, #tpu.memory_space<vmem>>, vector<32x128xf32>
    %cst = arith.constant dense<0.000000e+00> : vector<8x128xf32>
    %3 = tpu.matmul %0, %2, %cst {dimension_numbers = #tpu.dot_dimension_numbers<[1], [0], [0], [1], [0, 0, 1, 1], [], []>} : vector<8x32xf32>, vector<32x128xf32>, vector<8x128xf32> -> vector<8x128xf32>
    %c0_5 = arith.constant 0 : index
    %c0_6 = arith.constant 0 : index
    %4 = vector.load %arg4[%c0_5, %c0_6] : memref<1x128xf32, #tpu.memory_space<vmem>>, vector<1x128xf32>
    %5 = vector.broadcast %4 : vector<1x128xf32> to vector<8x128xf32>
    %6 = arith.addf %3, %5 : vector<8x128xf32>
    %cst_7 = arith.constant 0.000000e+00 : f32
    %7 = vector.broadcast %cst_7 : f32 to vector<8x128xf32>
    %8 = arith.maximumf %6, %7 : vector<8x128xf32>
    %c0_8 = arith.constant 0 : index
    %c0_9 = arith.constant 0 : index
    %9 = vector.load %arg5[%c0_8, %c0_9] : memref<128x384xf32, #tpu.memory_space<vmem>>, vector<128x384xf32>
    %cst_10 = arith.constant dense<0.000000e+00> : vector<8x384xf32>
    %10 = tpu.matmul %8, %9, %cst_10 {dimension_numbers = #tpu.dot_dimension_numbers<[1], [0], [0], [1], [0, 0, 1, 1], [], []>} : vector<8x128xf32>, vector<128x384xf32>, vector<8x384xf32> -> vector<8x384xf32>
    %c0_11 = arith.constant 0 : index
    %c0_12 = arith.constant 0 : index
    %11 = vector.load %arg6[%c0_11, %c0_12] : memref<1x384xf32, #tpu.memory_space<vmem>>, vector<1x384xf32>
    %12 = vector.broadcast %11 : vector<1x384xf32> to vector<8x384xf32>
    %13 = arith.addf %10, %12 : vector<8x384xf32>
    %c0_13 = arith.constant 0 : index
    %c0_14 = arith.constant 0 : index
    %14 = vector.load %arg7[%c0_13, %c0_14] : memref<128x384xf32, #tpu.memory_space<vmem>>, vector<128x384xf32>
    %cst_15 = arith.constant dense<0.000000e+00> : vector<8x384xf32>
    %15 = tpu.matmul %1, %14, %cst_15 {dimension_numbers = #tpu.dot_dimension_numbers<[1], [0], [0], [1], [0, 0, 1, 1], [], []>} : vector<8x128xf32>, vector<128x384xf32>, vector<8x384xf32> -> vector<8x384xf32>
    %16 = vector.extract_strided_slice %13 {offsets = [0, 0], sizes = [8, 128], strides = [1, 1]} : vector<8x384xf32> to vector<8x128xf32>
    %17 = vector.extract_strided_slice %15 {offsets = [0, 0], sizes = [8, 128], strides = [1, 1]} : vector<8x384xf32> to vector<8x128xf32>
    %18 = arith.addf %16, %17 : vector<8x128xf32>
    %19 = arith.negf %18 : vector<8x128xf32>
    %20 = math.exp %19 : vector<8x128xf32>
    %cst_16 = arith.constant 1.000000e+00 : f32
    %21 = vector.broadcast %cst_16 : f32 to vector<8x128xf32>
    %22 = arith.addf %21, %20 : vector<8x128xf32>
    %23 = arith.divf %21, %22 : vector<8x128xf32>
    %24 = vector.extract_strided_slice %13 {offsets = [0, 128], sizes = [8, 128], strides = [1, 1]} : vector<8x384xf32> to vector<8x128xf32>
    %25 = vector.extract_strided_slice %15 {offsets = [0, 128], sizes = [8, 128], strides = [1, 1]} : vector<8x384xf32> to vector<8x128xf32>
    %26 = arith.addf %24, %25 : vector<8x128xf32>
    %27 = arith.negf %26 : vector<8x128xf32>
    %28 = math.exp %27 : vector<8x128xf32>
    %cst_17 = arith.constant 1.000000e+00 : f32
    %29 = vector.broadcast %cst_17 : f32 to vector<8x128xf32>
    %30 = arith.addf %29, %28 : vector<8x128xf32>
    %31 = arith.divf %29, %30 : vector<8x128xf32>
    %32 = vector.extract_strided_slice %13 {offsets = [0, 256], sizes = [8, 128], strides = [1, 1]} : vector<8x384xf32> to vector<8x128xf32>
    %33 = vector.extract_strided_slice %15 {offsets = [0, 256], sizes = [8, 128], strides = [1, 1]} : vector<8x384xf32> to vector<8x128xf32>
    %c0_18 = arith.constant 0 : index
    %c0_19 = arith.constant 0 : index
    %34 = vector.load %arg8[%c0_18, %c0_19] : memref<1x128xf32, #tpu.memory_space<vmem>>, vector<1x128xf32>
    %35 = vector.broadcast %34 : vector<1x128xf32> to vector<8x128xf32>
    %36 = arith.addf %33, %35 : vector<8x128xf32>
    %37 = arith.mulf %23, %36 : vector<8x128xf32>
    %38 = arith.addf %32, %37 : vector<8x128xf32>
    %39 = math.tanh %38 : vector<8x128xf32>
    %cst_20 = arith.constant 1.000000e+00 : f32
    %40 = vector.broadcast %cst_20 : f32 to vector<8x128xf32>
    %41 = arith.subf %40, %31 : vector<8x128xf32>
    %42 = arith.mulf %41, %39 : vector<8x128xf32>
    %43 = arith.mulf %31, %1 : vector<8x128xf32>
    %44 = arith.addf %42, %43 : vector<8x128xf32>
    %c0_21 = arith.constant 0 : index
    %c0_22 = arith.constant 0 : index
    %45 = vector.load %arg9[%c0_21, %c0_22] : memref<128x128xf32, #tpu.memory_space<vmem>>, vector<128x128xf32>
    %cst_23 = arith.constant dense<0.000000e+00> : vector<8x128xf32>
    %46 = tpu.matmul %44, %45, %cst_23 {dimension_numbers = #tpu.dot_dimension_numbers<[1], [0], [0], [1], [0, 0, 1, 1], [], []>} : vector<8x128xf32>, vector<128x128xf32>, vector<8x128xf32> -> vector<8x128xf32>
    %c0_24 = arith.constant 0 : index
    %c0_25 = arith.constant 0 : index
    %47 = vector.load %arg10[%c0_24, %c0_25] : memref<1x128xf32, #tpu.memory_space<vmem>>, vector<1x128xf32>
    %48 = vector.broadcast %47 : vector<1x128xf32> to vector<8x128xf32>
    %49 = arith.addf %46, %48 : vector<8x128xf32>
    %c0_26 = arith.constant 0 : index
    %c0_27 = arith.constant 0 : index
    %50 = vector.load %arg11[%c0_26, %c0_27] : memref<8x128xf32, #tpu.memory_space<vmem>>, vector<8x128xf32>
    tpu.vector_store %arg11[%c0_26, %c0_27], %49 {strides = array<i32>} : memref<8x128xf32, #tpu.memory_space<vmem>>, vector<8x128xf32>,
    %c0_28 = arith.constant 0 : index
    %c0_29 = arith.constant 0 : index
    %51 = vector.load %arg12[%c0_28, %c0_29] : memref<8x128xf32, #tpu.memory_space<vmem>>, vector<8x128xf32>
    tpu.vector_store %arg12[%c0_28, %c0_29], %44 {strides = array<i32>} : memref<8x128xf32, #tpu.memory_space<vmem>>, vector<8x128xf32>,
    return
  }
  func.func @transform_0(%arg0: i32) -> (i32, i32) {
    %c0_i32 = arith.constant 0 : i32
    %c0_i32_0 = arith.constant 0 : i32
    return %arg0, %c0_i32 : i32, i32
  }
  func.func @transform_1(%arg0: i32) -> (i32, i32) {
    %c0_i32 = arith.constant 0 : i32
    %c0_i32_0 = arith.constant 0 : i32
    return %arg0, %c0_i32 : i32, i32
  }
  func.func @transform_2(%arg0: i32) -> (i32, i32) {
    %c0_i32 = arith.constant 0 : i32
    %c0_i32_0 = arith.constant 0 : i32
    %c0_i32_1 = arith.constant 0 : i32
    return %c0_i32, %c0_i32_0 : i32, i32
  }
  func.func @transform_3(%arg0: i32) -> (i32, i32) {
    %c0_i32 = arith.constant 0 : i32
    %c0_i32_0 = arith.constant 0 : i32
    %c0_i32_1 = arith.constant 0 : i32
    return %c0_i32, %c0_i32_0 : i32, i32
  }
  func.func @transform_4(%arg0: i32) -> (i32, i32) {
    %c0_i32 = arith.constant 0 : i32
    %c0_i32_0 = arith.constant 0 : i32
    %c0_i32_1 = arith.constant 0 : i32
    return %c0_i32, %c0_i32_0 : i32, i32
  }
  func.func @transform_5(%arg0: i32) -> (i32, i32) {
    %c0_i32 = arith.constant 0 : i32
    %c0_i32_0 = arith.constant 0 : i32
    %c0_i32_1 = arith.constant 0 : i32
    return %c0_i32, %c0_i32_0 : i32, i32
  }
  func.func @transform_6(%arg0: i32) -> (i32, i32) {
    %c0_i32 = arith.constant 0 : i32
    %c0_i32_0 = arith.constant 0 : i32
    %c0_i32_1 = arith.constant 0 : i32
    return %c0_i32, %c0_i32_0 : i32, i32
  }
  func.func @transform_7(%arg0: i32) -> (i32, i32) {
    %c0_i32 = arith.constant 0 : i32
    %c0_i32_0 = arith.constant 0 : i32
    %c0_i32_1 = arith.constant 0 : i32
    return %c0_i32, %c0_i32_0 : i32, i32
  }
  func.func @transform_8(%arg0: i32) -> (i32, i32) {
    %c0_i32 = arith.constant 0 : i32
    %c0_i32_0 = arith.constant 0 : i32
    %c0_i32_1 = arith.constant 0 : i32
    return %c0_i32, %c0_i32_0 : i32, i32
  }
  func.func @transform_9(%arg0: i32) -> (i32, i32) {
    %c0_i32 = arith.constant 0 : i32
    %c0_i32_0 = arith.constant 0 : i32
    %c0_i32_1 = arith.constant 0 : i32
    return %c0_i32, %c0_i32_0 : i32, i32
  }
  func.func @transform_10(%arg0: i32) -> (i32, i32) {
    %c0_i32 = arith.constant 0 : i32
    %c0_i32_0 = arith.constant 0 : i32
    return %arg0, %c0_i32 : i32, i32
  }
  func.func @transform_11(%arg0: i32) -> (i32, i32) {
    %c0_i32 = arith.constant 0 : i32
    %c0_i32_0 = arith.constant 0 : i32
    return %arg0, %c0_i32 : i32, i32
  }
}

</mosaic_0001>

<llo_original>
// kernel: tpu_custom_call.1
$region0: #{tpu_custom_call.1}
  #allocation0 [shape = 'u32[]', space=smem, size = 0x4, offset = 0x4, fixed_abs, tag = 'smem constant byte address 0x4 - core index']
  #allocation1 [shape = 'u32[144,128]{1,0:T(1,128)}', space=vmem, size = 0x12000, scoped, tag = 'internal scratch']
  %s0 = inlined_call_operand.hbm [shape: f32[8,32], index: 0, kind: input, shape index: {}]
  %s1 = inlined_call_operand.hbm [shape: f32[8,128], index: 1, kind: input, shape index: {}]
  %s2 = inlined_call_operand.hbm [shape: f32[32,128], index: 2, kind: input, shape index: {}]
  %s3 = inlined_call_operand.vmem [shape: f32[1,128], index: 3, kind: input, shape index: {}]
  %s4 = inlined_call_operand.hbm [shape: f32[128,384], index: 4, kind: input, shape index: {}]
  %s5 = inlined_call_operand.vmem [shape: f32[1,384], index: 5, kind: input, shape index: {}]
  %s6 = inlined_call_operand.hbm [shape: f32[128,384], index: 6, kind: input, shape index: {}]
  %s7 = inlined_call_operand.vmem [shape: f32[1,128], index: 7, kind: input, shape index: {}]
  %s8 = inlined_call_operand.hbm [shape: f32[128,128], index: 8, kind: input, shape index: {}]
  %s9 = inlined_call_operand.vmem [shape: f32[1,128], index: 9, kind: input, shape index: {}]
  %s10 = inlined_call_operand.hbm [shape: f32[8,128], index: 10, kind: output, shape index: {0}]
  %s11 = inlined_call_operand.hbm [shape: f32[8,128], index: 11, kind: output, shape index: {1}]
  %12 = xla_tuple %s10, %s11
  %s13 = sld [smem:[#allocation0]]
  $region82: #{tpu_custom_call.1} parent=0
    _
  %s15 = ssub.s32 1, %s13
  %s16 = scalar_select 0, %s15, %s13
  $region1: #{tpu_custom_call.1} parent=0
    #allocation2 [shape = 'u8[4096]{0}', space=vmem, size = 0x1000, scoped, tag = 'input window, operand 0, single buffered']
    #allocation3 [shape = 's32[1]{0}', space=sflag, size = 0x4, scoped, tag = 'scoped memory for tpu_custom_call.1']
    #allocation4 [shape = 's32[1]{0}', space=sflag, size = 0x4, scoped, tag = 'scoped memory for tpu_custom_call.1']
    #allocation5 [shape = 'u8[4096]{0}', space=vmem, size = 0x1000, scoped, tag = 'input window, operand 1, single buffered']
    #allocation6 [shape = 's32[1]{0}', space=sflag, size = 0x4, scoped, tag = 'scoped memory for tpu_custom_call.1']
    #allocation7 [shape = 'u8[16384]{0}', space=vmem, size = 0x4000, scoped, tag = 'input window, operand 2, single buffered']
    #allocation8 [shape = 'u8[196608]{0}', space=vmem, size = 0x30000, scoped, tag = 'input window, operand 4, single buffered']
    #allocation9 [shape = 's32[1]{0}', space=sflag, size = 0x4, scoped, tag = 'scoped memory for tpu_custom_call.1']
    #allocation10 [shape = 'u8[196608]{0}', space=vmem, size = 0x30000, scoped, tag = 'input window, operand 6, single buffered']
    #allocation11 [shape = 'u8[65536]{0}', space=vmem, size = 0x10000, scoped, tag = 'input window, operand 8, single buffered']
    #allocation12 [shape = 's32[1]{0}', space=sflag, size = 0x4, scoped, tag = 'scoped memory for tpu_custom_call.1']
    #allocation13 [shape = 'u8[4096]{0}', space=vmem, size = 0x1000, scoped, tag = 'output window, operand 0, single buffered']
    #allocation14 [shape = 'u8[4096]{0}', space=vmem, size = 0x1000, scoped, tag = 'output window, operand 1, single buffered']
    #allocation15 [shape = 's32[1]{0}', space=sflag, size = 0x4, scoped, tag = 'scoped memory for tpu_custom_call.1']
    %17 = vsyncpa [#allocation3], 0
    %18 = vsyncpa [#allocation6], 0
    %19 = vsyncpa [#allocation9], 0
    %20 = vsyncpa [#allocation12], 0
    %21 = vsyncpa [#allocation4], 0
    %22 = vsyncpa [#allocation15], 0
    // Predicated region
    $region2: #{tpu_custom_call.1} parent=1 // pred_check
      _
    $region3: #{tpu_custom_call.1} parent=1 // pred_check_branch
      %24 = sbr.rel (0) target = $region5
    $region4: #{tpu_custom_call.1} parent=1 // pred_region
      %s26 = ssub.s32 128, 128
      %27 = vsyncadd [#allocation3], %s26
      %s29 = sshll.u32 [#allocation2], 4
      %s30 = int_to_ptr.vmem [resolvable:$true] %s29
      %32 = dma.hbm_to_vmem [thread:$0]  %s0, 128, %s30, [#allocation3]
    $region5: #{tpu_custom_call.1} parent=1 // pred_fallthru
      _
    // Predicated region
    $region6: #{tpu_custom_call.1} parent=1 // pred_check
      _
    $region7: #{tpu_custom_call.1} parent=1 // pred_check_branch
      %34 = sbr.rel (0) target = $region9
    $region8: #{tpu_custom_call.1} parent=1 // pred_region
      %s36 = ssub.s32 128, 128
      %37 = vsyncadd [#allocation6], %s36
      %s39 = sshll.u32 [#allocation5], 4
      %s40 = int_to_ptr.vmem [resolvable:$true] %s39
      %42 = dma.hbm_to_vmem [thread:$0]  %s1, 128, %s40, [#allocation6]
    $region9: #{tpu_custom_call.1} parent=1 // pred_fallthru
      _
    // Predicated region
    $region10: #{tpu_custom_call.1} parent=1 // pred_check
      _
    $region11: #{tpu_custom_call.1} parent=1 // pred_check_branch
      %44 = sbr.rel (0) target = $region13
    $region12: #{tpu_custom_call.1} parent=1 // pred_region
      %s46 = ssub.s32 512, 512
      %47 = vsyncadd [#allocation6], %s46
      %s48 = sshll.u32 [#allocation7], 4
      %s49 = int_to_ptr.vmem [resolvable:$true] %s48
      %54 = dma.hbm_to_vmem [thread:$0]  %s2, 512, %s49, [#allocation6], 128, 128, 8
    $region13: #{tpu_custom_call.1} parent=1 // pred_fallthru
      _
    // Predicated region
    $region14: #{tpu_custom_call.1} parent=1 // pred_check
      _
    $region15: #{tpu_custom_call.1} parent=1 // pred_check_branch
      %56 = sbr.rel (0) target = $region17
    $region16: #{tpu_custom_call.1} parent=1 // pred_region
      _
    $region17: #{tpu_custom_call.1} parent=1 // pred_fallthru
      _
    // Predicated region
    $region18: #{tpu_custom_call.1} parent=1 // pred_check
      _
    $region19: #{tpu_custom_call.1} parent=1 // pred_check_branch
      %58 = sbr.rel (0) target = $region21
    $region20: #{tpu_custom_call.1} parent=1 // pred_region
      %s60 = ssub.s32 6144, 6144
      %61 = vsyncadd [#allocation9], %s60
      %s62 = sshll.u32 [#allocation8], 4
      %s63 = int_to_ptr.vmem [resolvable:$true] %s62
      %68 = dma.hbm_to_vmem [thread:$0]  %s4, 6144, %s63, [#allocation9], 384, 384, 24
    $region21: #{tpu_custom_call.1} parent=1 // pred_fallthru
      _
    // Predicated region
    $region22: #{tpu_custom_call.1} parent=1 // pred_check
      _
    $region23: #{tpu_custom_call.1} parent=1 // pred_check_branch
      %70 = sbr.rel (0) target = $region25
    $region24: #{tpu_custom_call.1} parent=1 // pred_region
      _
    $region25: #{tpu_custom_call.1} parent=1 // pred_fallthru
      _
    // Predicated region
    $region26: #{tpu_custom_call.1} parent=1 // pred_check
      _
    $region27: #{tpu_custom_call.1} parent=1 // pred_check_branch
      %72 = sbr.rel (0) target = $region29
    $region28: #{tpu_custom_call.1} parent=1 // pred_region
      %s74 = ssub.s32 6144, 6144
      %75 = vsyncadd [#allocation9], %s74
      %s76 = sshll.u32 [#allocation10], 4
      %s77 = int_to_ptr.vmem [resolvable:$true] %s76
      %82 = dma.hbm_to_vmem [thread:$0]  %s6, 6144, %s77, [#allocation9], 384, 384, 24
    $region29: #{tpu_custom_call.1} parent=1 // pred_fallthru
      _
    // Predicated region
    $region30: #{tpu_custom_call.1} parent=1 // pred_check
      _
    $region31: #{tpu_custom_call.1} parent=1 // pred_check_branch
      %84 = sbr.rel (0) target = $region33
    $region32: #{tpu_custom_call.1} parent=1 // pred_region
      _
    $region33: #{tpu_custom_call.1} parent=1 // pred_fallthru
      _
    // Predicated region
    $region34: #{tpu_custom_call.1} parent=1 // pred_check
      _
    $region35: #{tpu_custom_call.1} parent=1 // pred_check_branch
      %86 = sbr.rel (0) target = $region37
    $region36: #{tpu_custom_call.1} parent=1 // pred_region
      %s88 = ssub.s32 2048, 2048
      %89 = vsyncadd [#allocation12], %s88
      %s90 = sshll.u32 [#allocation11], 4
      %s91 = int_to_ptr.vmem [resolvable:$true] %s90
      %96 = dma.hbm_to_vmem [thread:$0]  %s8, 2048, %s91, [#allocation12], 128, 128, 8
    $region37: #{tpu_custom_call.1} parent=1 // pred_fallthru
      _
    // Predicated region
    $region38: #{tpu_custom_call.1} parent=1 // pred_check
      _
    $region39: #{tpu_custom_call.1} parent=1 // pred_check_branch
      %98 = sbr.rel (0) target = $region41
    $region40: #{tpu_custom_call.1} parent=1 // pred_region
      _
    $region41: #{tpu_custom_call.1} parent=1 // pred_fallthru
      _
    // Predicated region
    $region42: #{tpu_custom_call.1} parent=1 // pred_check
      _
    $region43: #{tpu_custom_call.1} parent=1 // pred_check_branch
      %100 = sbr.rel (0) target = $region45
    $region44: #{tpu_custom_call.1} parent=1 // pred_region
      %101 = dma.done [#allocation3], 128
    $region45: #{tpu_custom_call.1} parent=1 // pred_fallthru
      _
    // Predicated region
    $region46: #{tpu_custom_call.1} parent=1 // pred_check
      _
    $region47: #{tpu_custom_call.1} parent=1 // pred_check_branch
      %103 = sbr.rel (0) target = $region49
    $region48: #{tpu_custom_call.1} parent=1 // pred_region
      %104 = dma.done [#allocation6], 128
    $region49: #{tpu_custom_call.1} parent=1 // pred_fallthru
      _
    // Predicated region
    $region50: #{tpu_custom_call.1} parent=1 // pred_check
      _
    $region51: #{tpu_custom_call.1} parent=1 // pred_check_branch
      %106 = sbr.rel (0) target = $region53
    $region52: #{tpu_custom_call.1} parent=1 // pred_region
      %107 = dma.done [#allocation6], 512
    $region53: #{tpu_custom_call.1} parent=1 // pred_fallthru
      _
    // Predicated region
    $region54: #{tpu_custom_call.1} parent=1 // pred_check
      _
    $region55: #{tpu_custom_call.1} parent=1 // pred_check_branch
      %109 = sbr.rel (0) target = $region57
    $region56: #{tpu_custom_call.1} parent=1 // pred_region
      %110 = dma.done [#allocation9], 6144
    $region57: #{tpu_custom_call.1} parent=1 // pred_fallthru
      _
    // Predicated region
    $region58: #{tpu_custom_call.1} parent=1 // pred_check
      _
    $region59: #{tpu_custom_call.1} parent=1 // pred_check_branch
      %112 = sbr.rel (0) target = $region61
    $region60: #{tpu_custom_call.1} parent=1 // pred_region
      %113 = dma.done [#allocation9], 6144
    $region61: #{tpu_custom_call.1} parent=1 // pred_fallthru
      _
    // Predicated region
    $region62: #{tpu_custom_call.1} parent=1 // pred_check
      _
    $region63: #{tpu_custom_call.1} parent=1 // pred_check_branch
      %115 = sbr.rel (0) target = $region65
    $region64: #{tpu_custom_call.1} parent=1 // pred_region
      %116 = dma.done [#allocation12], 2048
    $region65: #{tpu_custom_call.1} parent=1 // pred_fallthru
      _
    %v117 = vld [vmem:[#allocation2] sm:$0xff]
    %v118 = vld [vmem:[#allocation5] sm:$0xff]
    %v119 = vld [vmem:[#allocation7] sm:$0xff]
    %v120 = vld [vmem:[#allocation7 + $0x8] sm:$0xff]
    %v121 = vld [vmem:[#allocation7 + $0x10] sm:$0xff]
    %v122 = vld [vmem:[#allocation7 + $0x18] sm:$0xff]
    %v123 = vld [vmem:[%s3] sm:$0x1]
    %v125 = vlaneseq
    %v126 = vshrl.u32 %v125, 7
    %v127 = vsub.s32 0, %v126
    %v128 = vrot.slane %v123, %v127
    %vm130 = vcmask 261120
    %v132 = vsel %vm130, %v117, 0
    %134 = vmatprep.subr.mxu0 0.0
    %135 = vmatpush1.msra.mxu0 %v119
    %136 = vmatprep.subr.mxu0 0.0
    %137 = vmatpush1.msra.mxu0 %v120
    %138 = vmatprep.subr.mxu0 0.0
    %139 = vmatpush1.msra.mxu0 %v121
    %140 = vmatprep.subr.mxu0 0.0
    %141 = vmatpush1.msra.mxu0 %v122
    %142 = vmatprep.subr.mxu0 0.0
    %143 = vmatpush1.msra.mxu0 0.0
    %144 = vmatprep.subr.mxu0 0.0
    %145 = vmatpush1.msra.mxu0 0.0
    %146 = vmatprep.subr.mxu0 0.0
    %147 = vmatpush1.msra.mxu0 0.0
    %148 = vmatprep.subr.mxu0 0.0
    %149 = vmatpush1.msra.mxu0 0.0
    %150 = vmatprep.subr.mxu0 0.0
    %151 = vmatpush1.msra.mxu0 0.0
    %152 = vmatprep.subr.mxu0 0.0
    %153 = vmatpush1.msra.mxu0 0.0
    %154 = vmatprep.subr.mxu0 0.0
    %155 = vmatpush1.msra.mxu0 0.0
    %156 = vmatprep.subr.mxu0 0.0
    %157 = vmatpush1.msra.mxu0 0.0
    %158 = vmatprep.subr.mxu0 0.0
    %159 = vmatpush1.msra.mxu0 0.0
    %160 = vmatprep.subr.mxu0 0.0
    %161 = vmatpush1.msra.mxu0 0.0
    %162 = vmatprep.subr.mxu0 0.0
    %163 = vmatpush1.msra.mxu0 0.0
    %164 = vmatprep.subr.mxu0 0.0
    %165 = vmatpush1.msra.mxu0 0.0
    %166 = vmatprep.subr.mxu0 0.0
    %167 = vmatpush1.msra.mxu0 0.0
    %168 = vmatprep.subr.mxu0 0.0
    %169 = vmatpush1.msra.mxu0 0.0
    %170 = vmatprep.subr.mxu0 0.0
    %171 = vmatpush1.msra.mxu0 0.0
    %172 = vmatprep.subr.mxu0 0.0
    %173 = vmatpush1.msra.mxu0 0.0
    %174 = vmatprep.subr.mxu0 0.0
    %175 = vmatpush1.msra.mxu0 0.0
    %176 = vmatprep.subr.mxu0 0.0
    %177 = vmatpush1.msra.mxu0 0.0
    %178 = vmatprep.subr.mxu0 0.0
    %179 = vmatpush1.msra.mxu0 0.0
    %180 = vmatprep.subr.mxu0 0.0
    %181 = vmatpush1.msra.mxu0 0.0
    %182 = vmatprep.subr.mxu0 0.0
    %183 = vmatpush1.msra.mxu0 0.0
    %184 = vmatprep.subr.mxu0 0.0
    %185 = vmatpush1.msra.mxu0 0.0
    %186 = vmatprep.subr.mxu0 0.0
    %187 = vmatpush1.msra.mxu0 0.0
    %188 = vmatprep.subr.mxu0 0.0
    %189 = vmatpush1.msra.mxu0 0.0
    %190 = vmatprep.subr.mxu0 0.0
    %191 = vmatpush1.msra.mxu0 0.0
    %192 = vmatprep.subr.mxu0 0.0
    %193 = vmatpush1.msra.mxu0 0.0
    %194 = vmatprep.subr.mxu0 0.0
    %195 = vmatpush1.msra.mxu0 0.0
    %196 = vmatprep.subr.mxu0 0.0
    %197 = vmatpush1.msra.mxu0 0.0
    %198 = vmatprep.mubr.f32.mxu0 0.0
    %199 = vmatmul.mubr.f32.gmra.mrb[0].mxu0 %v132
    %v200 = vpop.f32.mrb[0].mxu0
    %v201 = vadd.f32 %v128, %v200
    %v202 = vpop.f32.mrb[0].mxu0
    %203 = vdwg.mxu0
    %v204 = vmax.f32 %v201, 0.0
    %v205 = vld [vmem:[#allocation8] sm:$0xff]
    %v206 = vld [vmem:[#allocation8 + $0x8] sm:$0xff]
    %v207 = vld [vmem:[#allocation8 + $0x10] sm:$0xff]
    %v208 = vld [vmem:[#allocation8 + $0x18] sm:$0xff]
    %v209 = vld [vmem:[#allocation8 + $0x20] sm:$0xff]
    %v210 = vld [vmem:[#allocation8 + $0x28] sm:$0xff]
    %v211 = vld [vmem:[#allocation8 + $0x30] sm:$0xff]
    %v212 = vld [vmem:[#allocation8 + $0x38] sm:$0xff]
    %v213 = vld [vmem:[#allocation8 + $0x40] sm:$0xff]
    %v214 = vld [vmem:[#allocation8 + $0x48] sm:$0xff]
    %v215 = vld [vmem:[#allocation8 + $0x50] sm:$0xff]
    %v216 = vld [vmem:[#allocation8 + $0x58] sm:$0xff]
    %v217 = vld [vmem:[#allocation8 + $0x60] sm:$0xff]
    %v218 = vld [vmem:[#allocation8 + $0x68] sm:$0xff]
    %v219 = vld [vmem:[#allocation8 + $0x70] sm:$0xff]
    %v220 = vld [vmem:[#allocation8 + $0x78] sm:$0xff]
    %v221 = vld [vmem:[#allocation8 + $0x80] sm:$0xff]
    %v222 = vld [vmem:[#allocation8 + $0x88] sm:$0xff]
    %v223 = vld [vmem:[#allocation8 + $0x90] sm:$0xff]
    %v224 = vld [vmem:[#allocation8 + $0x98] sm:$0xff]
    %v225 = vld [vmem:[#allocation8 + $0xa0] sm:$0xff]
    %v226 = vld [vmem:[#allocation8 + $0xa8] sm:$0xff]
    %v227 = vld [vmem:[#allocation8 + $0xb0] sm:$0xff]
    %v228 = vld [vmem:[#allocation8 + $0xb8] sm:$0xff]
    %v229 = vld [vmem:[#allocation8 + $0xc0] sm:$0xff]
    %v230 = vld [vmem:[#allocation8 + $0xc8] sm:$0xff]
    %v231 = vld [vmem:[#allocation8 + $0xd0] sm:$0xff]
    %v232 = vld [vmem:[#allocation8 + $0xd8] sm:$0xff]
    %v233 = vld [vmem:[#allocation8 + $0xe0] sm:$0xff]
    %v234 = vld [vmem:[#allocation8 + $0xe8] sm:$0xff]
    %v235 = vld [vmem:[#allocation8 + $0xf0] sm:$0xff]
    %v236 = vld [vmem:[#allocation8 + $0xf8] sm:$0xff]
    %v237 = vld [vmem:[#allocation8 + $0x100] sm:$0xff]
    %v238 = vld [vmem:[#allocation8 + $0x108] sm:$0xff]
    %v239 = vld [vmem:[#allocation8 + $0x110] sm:$0xff]
    %v240 = vld [vmem:[#allocation8 + $0x118] sm:$0xff]
    %v241 = vld [vmem:[#allocation8 + $0x120] sm:$0xff]
    %v242 = vld [vmem:[#allocation8 + $0x128] sm:$0xff]
    %v243 = vld [vmem:[#allocation8 + $0x130] sm:$0xff]
    %v244 = vld [vmem:[#allocation8 + $0x138] sm:$0xff]
    %v245 = vld [vmem:[#allocation8 + $0x140] sm:$0xff]
    %v246 = vld [vmem:[#allocation8 + $0x148] sm:$0xff]
    %v247 = vld [vmem:[#allocation8 + $0x150] sm:$0xff]
    %v248 = vld [vmem:[#allocation8 + $0x158] sm:$0xff]
    %v249 = vld [vmem:[#allocation8 + $0x160] sm:$0xff]
    %v250 = vld [vmem:[#allocation8 + $0x168] sm:$0xff]
    %v251 = vld [vmem:[#allocation8 + $0x170] sm:$0xff]
    %v252 = vld [vmem:[#allocation8 + $0x178] sm:$0xff]
    %v253 = vld [vmem:[%s5] sm:$0x7]
    %v255 = vlaneseq
    %v256 = vshrl.u32 %v255, 7
    %v257 = vsub.s32 0, %v256
    %v258 = vrot.slane %v253, %v257
    %v259 = vlaneseq
    %v260 = vshrl.u32 %v259, 7
    %v261 = vsub.s32 1, %v260
    %v262 = vrot.slane %v253, %v261
    %v263 = vlaneseq
    %v264 = vshrl.u32 %v263, 7
    %v265 = vsub.s32 2, %v264
    %v266 = vrot.slane %v253, %v265
    %270 = vmatprep.subr.mxu0 %v206
    %271 = vmatpush1.msra.mxu0 %v205
    %272 = vmatprep.subr.mxu0 %v209
    %273 = vmatpush1.msra.mxu0 %v208
    %274 = vmatprep.subr.mxu0 %v212
    %275 = vmatpush1.msra.mxu0 %v211
    %276 = vmatprep.subr.mxu0 %v215
    %277 = vmatpush1.msra.mxu0 %v214
    %278 = vmatprep.subr.mxu0 %v218
    %279 = vmatpush1.msra.mxu0 %v217
    %280 = vmatprep.subr.mxu0 %v221
    %281 = vmatpush1.msra.mxu0 %v220
    %282 = vmatprep.subr.mxu0 %v224
    %283 = vmatpush1.msra.mxu0 %v223
    %284 = vmatprep.subr.mxu0 %v227
    %285 = vmatpush1.msra.mxu0 %v226
    %286 = vmatprep.subr.mxu0 %v230
    %287 = vmatpush1.msra.mxu0 %v229
    %288 = vmatprep.subr.mxu0 %v233
    %289 = vmatpush1.msra.mxu0 %v232
    %290 = vmatprep.subr.mxu0 %v236
    %291 = vmatpush1.msra.mxu0 %v235
    %292 = vmatprep.subr.mxu0 %v239
    %293 = vmatpush1.msra.mxu0 %v238
    %294 = vmatprep.subr.mxu0 %v242
    %295 = vmatpush1.msra.mxu0 %v241
    %296 = vmatprep.subr.mxu0 %v245
    %297 = vmatpush1.msra.mxu0 %v244
    %298 = vmatprep.subr.mxu0 %v248
    %299 = vmatpush1.msra.mxu0 %v247
    %300 = vmatprep.subr.mxu0 %v251
    %301 = vmatpush1.msra.mxu0 %v250
    %302 = vmatprep.subr.mxu0 0.0
    %303 = vmatpush1.msra.mxu0 0.0
    %304 = vmatprep.subr.mxu0 0.0
    %305 = vmatpush1.msra.mxu0 0.0
    %306 = vmatprep.subr.mxu0 0.0
    %307 = vmatpush1.msra.mxu0 0.0
    %308 = vmatprep.subr.mxu0 0.0
    %309 = vmatpush1.msra.mxu0 0.0
    %310 = vmatprep.subr.mxu0 0.0
    %311 = vmatpush1.msra.mxu0 0.0
    %312 = vmatprep.subr.mxu0 0.0
    %313 = vmatpush1.msra.mxu0 0.0
    %314 = vmatprep.subr.mxu0 0.0
    %315 = vmatpush1.msra.mxu0 0.0
    %316 = vmatprep.subr.mxu0 0.0
    %317 = vmatpush1.msra.mxu0 0.0
    %318 = vmatprep.subr.mxu0 0.0
    %319 = vmatpush1.msra.mxu0 0.0
    %320 = vmatprep.subr.mxu0 0.0
    %321 = vmatpush1.msra.mxu0 0.0
    %322 = vmatprep.subr.mxu0 0.0
    %323 = vmatpush1.msra.mxu0 0.0
    %324 = vmatprep.subr.mxu0 0.0
    %325 = vmatpush1.msra.mxu0 0.0
    %326 = vmatprep.subr.mxu0 0.0
    %327 = vmatpush1.msra.mxu0 0.0
    %328 = vmatprep.subr.mxu0 0.0
    %329 = vmatpush1.msra.mxu0 0.0
    %330 = vmatprep.subr.mxu0 0.0
    %331 = vmatpush1.msra.mxu0 0.0
    %332 = vmatprep.subr.mxu0 0.0
    %333 = vmatpush1.msra.mxu0 0.0
    %334 = vmatprep.mubr.f32.mxu0 0.0
    %335 = vmatmul.mubr.f32.gmra.mrb[0].mxu0 %v204
    %v336 = vpop.f32.mrb[0].mxu0
    %v337 = vadd.f32 %v258, %v336
    %v338 = vpop.f32.mrb[0].mxu0
    %v339 = vadd.f32 %v262, %v338
    %340 = vdwg.mxu0
    %341 = vmatprep.subr.mxu0 0.0
    %342 = vmatpush1.msra.mxu0 %v207
    %343 = vmatprep.subr.mxu0 0.0
    %344 = vmatpush1.msra.mxu0 %v210
    %345 = vmatprep.subr.mxu0 0.0
    %346 = vmatpush1.msra.mxu0 %v213
    %347 = vmatprep.subr.mxu0 0.0
    %348 = vmatpush1.msra.mxu0 %v216
    %349 = vmatprep.subr.mxu0 0.0
    %350 = vmatpush1.msra.mxu0 %v219
    %351 = vmatprep.subr.mxu0 0.0
    %352 = vmatpush1.msra.mxu0 %v222
    %353 = vmatprep.subr.mxu0 0.0
    %354 = vmatpush1.msra.mxu0 %v225
    %355 = vmatprep.subr.mxu0 0.0
    %356 = vmatpush1.msra.mxu0 %v228
    %357 = vmatprep.subr.mxu0 0.0
    %358 = vmatpush1.msra.mxu0 %v231
    %359 = vmatprep.subr.mxu0 0.0
    %360 = vmatpush1.msra.mxu0 %v234
    %361 = vmatprep.subr.mxu0 0.0
    %362 = vmatpush1.msra.mxu0 %v237
    %363 = vmatprep.subr.mxu0 0.0
    %364 = vmatpush1.msra.mxu0 %v240
    %365 = vmatprep.subr.mxu0 0.0
    %366 = vmatpush1.msra.mxu0 %v243
    %367 = vmatprep.subr.mxu0 0.0
    %368 = vmatpush1.msra.mxu0 %v246
    %369 = vmatprep.subr.mxu0 0.0
    %370 = vmatpush1.msra.mxu0 %v249
    %371 = vmatprep.subr.mxu0 0.0
    %372 = vmatpush1.msra.mxu0 %v252
    %373 = vmatprep.subr.mxu0 0.0
    %374 = vmatpush1.msra.mxu0 0.0
    %375 = vmatprep.subr.mxu0 0.0
    %376 = vmatpush1.msra.mxu0 0.0
    %377 = vmatprep.subr.mxu0 0.0
    %378 = vmatpush1.msra.mxu0 0.0
    %379 = vmatprep.subr.mxu0 0.0
    %380 = vmatpush1.msra.mxu0 0.0
    %381 = vmatprep.subr.mxu0 0.0
    %382 = vmatpush1.msra.mxu0 0.0
    %383 = vmatprep.subr.mxu0 0.0
    %384 = vmatpush1.msra.mxu0 0.0
    %385 = vmatprep.subr.mxu0 0.0
    %386 = vmatpush1.msra.mxu0 0.0
    %387 = vmatprep.subr.mxu0 0.0
    %388 = vmatpush1.msra.mxu0 0.0
    %389 = vmatprep.subr.mxu0 0.0
    %390 = vmatpush1.msra.mxu0 0.0
    %391 = vmatprep.subr.mxu0 0.0
    %392 = vmatpush1.msra.mxu0 0.0
    %393 = vmatprep.subr.mxu0 0.0
    %394 = vmatpush1.msra.mxu0 0.0
    %395 = vmatprep.subr.mxu0 0.0
    %396 = vmatpush1.msra.mxu0 0.0
    %397 = vmatprep.subr.mxu0 0.0
    %398 = vmatpush1.msra.mxu0 0.0
    %399 = vmatprep.subr.mxu0 0.0
    %400 = vmatpush1.msra.mxu0 0.0
    %401 = vmatprep.subr.mxu0 0.0
    %402 = vmatpush1.msra.mxu0 0.0
    %403 = vmatprep.subr.mxu0 0.0
    %404 = vmatpush1.msra.mxu0 0.0
    %405 = vmatprep.mubr.f32.mxu0 0.0
    %406 = vmatmul.mubr.f32.gmra.mrb[0].mxu0 %v204
    %v407 = vpop.f32.mrb[0].mxu0
    %v408 = vadd.f32 %v266, %v407
    %v409 = vpop.f32.mrb[0].mxu0
    %410 = vdwg.mxu0
    %v411 = vld [vmem:[#allocation10] sm:$0xff]
    %v412 = vld [vmem:[#allocation10 + $0x8] sm:$0xff]
    %v413 = vld [vmem:[#allocation10 + $0x10] sm:$0xff]
    %v414 = vld [vmem:[#allocation10 + $0x18] sm:$0xff]
    %v415 = vld [vmem:[#allocation10 + $0x20] sm:$0xff]
    %v416 = vld [vmem:[#allocation10 + $0x28] sm:$0xff]
    %v417 = vld [vmem:[#allocation10 + $0x30] sm:$0xff]
    %v418 = vld [vmem:[#allocation10 + $0x38] sm:$0xff]
    %v419 = vld [vmem:[#allocation10 + $0x40] sm:$0xff]
    %v420 = vld [vmem:[#allocation10 + $0x48] sm:$0xff]
    %v421 = vld [vmem:[#allocation10 + $0x50] sm:$0xff]
    %v422 = vld [vmem:[#allocation10 + $0x58] sm:$0xff]
    %v423 = vld [vmem:[#allocation10 + $0x60] sm:$0xff]
    %v424 = vld [vmem:[#allocation10 + $0x68] sm:$0xff]
    %v425 = vld [vmem:[#allocation10 + $0x70] sm:$0xff]
    %v426 = vld [vmem:[#allocation10 + $0x78] sm:$0xff]
    %v427 = vld [vmem:[#allocation10 + $0x80] sm:$0xff]
    %v428 = vld [vmem:[#allocation10 + $0x88] sm:$0xff]
    %v429 = vld [vmem:[#allocation10 + $0x90] sm:$0xff]
    %v430 = vld [vmem:[#allocation10 + $0x98] sm:$0xff]
    %v431 = vld [vmem:[#allocation10 + $0xa0] sm:$0xff]
    %v432 = vld [vmem:[#allocation10 + $0xa8] sm:$0xff]
    %v433 = vld [vmem:[#allocation10 + $0xb0] sm:$0xff]
    %v434 = vld [vmem:[#allocation10 + $0xb8] sm:$0xff]
    %v435 = vld [vmem:[#allocation10 + $0xc0] sm:$0xff]
    %v436 = vld [vmem:[#allocation10 + $0xc8] sm:$0xff]
    %v437 = vld [vmem:[#allocation10 + $0xd0] sm:$0xff]
    %v438 = vld [vmem:[#allocation10 + $0xd8] sm:$0xff]
    %v439 = vld [vmem:[#allocation10 + $0xe0] sm:$0xff]
    %v440 = vld [vmem:[#allocation10 + $0xe8] sm:$0xff]
    %v441 = vld [vmem:[#allocation10 + $0xf0] sm:$0xff]
    %v442 = vld [vmem:[#allocation10 + $0xf8] sm:$0xff]
    %v443 = vld [vmem:[#allocation10 + $0x100] sm:$0xff]
    %v444 = vld [vmem:[#allocation10 + $0x108] sm:$0xff]
    %v445 = vld [vmem:[#allocation10 + $0x110] sm:$0xff]
    %v446 = vld [vmem:[#allocation10 + $0x118] sm:$0xff]
    %v447 = vld [vmem:[#allocation10 + $0x120] sm:$0xff]
    %v448 = vld [vmem:[#allocation10 + $0x128] sm:$0xff]
    %v449 = vld [vmem:[#allocation10 + $0x130] sm:$0xff]
    %v450 = vld [vmem:[#allocation10 + $0x138] sm:$0xff]
    %v451 = vld [vmem:[#allocation10 + $0x140] sm:$0xff]
    %v452 = vld [vmem:[#allocation10 + $0x148] sm:$0xff]
    %v453 = vld [vmem:[#allocation10 + $0x150] sm:$0xff]
    %v454 = vld [vmem:[#allocation10 + $0x158] sm:$0xff]
    %v455 = vld [vmem:[#allocation10 + $0x160] sm:$0xff]
    %v456 = vld [vmem:[#allocation10 + $0x168] sm:$0xff]
    %v457 = vld [vmem:[#allocation10 + $0x170] sm:$0xff]
    %v458 = vld [vmem:[#allocation10 + $0x178] sm:$0xff]
    %459 = vmatprep.subr.mxu0 %v412
    %460 = vmatpush1.msra.mxu0 %v411
    %461 = vmatprep.subr.mxu0 %v415
    %462 = vmatpush1.msra.mxu0 %v414
    %463 = vmatprep.subr.mxu0 %v418
    %464 = vmatpush1.msra.mxu0 %v417
    %465 = vmatprep.subr.mxu0 %v421
    %466 = vmatpush1.msra.mxu0 %v420
    %467 = vmatprep.subr.mxu0 %v424
    %468 = vmatpush1.msra.mxu0 %v423
    %469 = vmatprep.subr.mxu0 %v427
    %470 = vmatpush1.msra.mxu0 %v426
    %471 = vmatprep.subr.mxu0 %v430
    %472 = vmatpush1.msra.mxu0 %v429
    %473 = vmatprep.subr.mxu0 %v433
    %474 = vmatpush1.msra.mxu0 %v432
    %475 = vmatprep.subr.mxu0 %v436
    %476 = vmatpush1.msra.mxu0 %v435
    %477 = vmatprep.subr.mxu0 %v439
    %478 = vmatpush1.msra.mxu0 %v438
    %479 = vmatprep.subr.mxu0 %v442
    %480 = vmatpush1.msra.mxu0 %v441
    %481 = vmatprep.subr.mxu0 %v445
    %482 = vmatpush1.msra.mxu0 %v444
    %483 = vmatprep.subr.mxu0 %v448
    %484 = vmatpush1.msra.mxu0 %v447
    %485 = vmatprep.subr.mxu0 %v451
    %486 = vmatpush1.msra.mxu0 %v450
    %487 = vmatprep.subr.mxu0 %v454
    %488 = vmatpush1.msra.mxu0 %v453
    %489 = vmatprep.subr.mxu0 %v457
    %490 = vmatpush1.msra.mxu0 %v456
    %491 = vmatprep.subr.mxu0 0.0
    %492 = vmatpush1.msra.mxu0 0.0
    %493 = vmatprep.subr.mxu0 0.0
    %494 = vmatpush1.msra.mxu0 0.0
    %495 = vmatprep.subr.mxu0 0.0
    %496 = vmatpush1.msra.mxu0 0.0
    %497 = vmatprep.subr.mxu0 0.0
    %498 = vmatpush1.msra.mxu0 0.0
    %499 = vmatprep.subr.mxu0 0.0
    %500 = vmatpush1.msra.mxu0 0.0
    %501 = vmatprep.subr.mxu0 0.0
    %502 = vmatpush1.msra.mxu0 0.0
    %503 = vmatprep.subr.mxu0 0.0
    %504 = vmatpush1.msra.mxu0 0.0
    %505 = vmatprep.subr.mxu0 0.0
    %506 = vmatpush1.msra.mxu0 0.0
    %507 = vmatprep.subr.mxu0 0.0
    %508 = vmatpush1.msra.mxu0 0.0
    %509 = vmatprep.subr.mxu0 0.0
    %510 = vmatpush1.msra.mxu0 0.0
    %511 = vmatprep.subr.mxu0 0.0
    %512 = vmatpush1.msra.mxu0 0.0
    %513 = vmatprep.subr.mxu0 0.0
    %514 = vmatpush1.msra.mxu0 0.0
    %515 = vmatprep.subr.mxu0 0.0
    %516 = vmatpush1.msra.mxu0 0.0
    %517 = vmatprep.subr.mxu0 0.0
    %518 = vmatpush1.msra.mxu0 0.0
    %519 = vmatprep.subr.mxu0 0.0
    %520 = vmatpush1.msra.mxu0 0.0
    %521 = vmatprep.subr.mxu0 0.0
    %522 = vmatpush1.msra.mxu0 0.0
    %523 = vmatprep.mubr.f32.mxu0 0.0
    %524 = vmatmul.mubr.f32.gmra.mrb[0].mxu0 %v118
    %v525 = vpop.f32.mrb[0].mxu0
    %v526 = vadd.f32 0.0, %v525
    %v527 = vpop.f32.mrb[0].mxu0
    %v528 = vadd.f32 0.0, %v527
    %529 = vdwg.mxu0
    %530 = vmatprep.subr.mxu0 0.0
    %531 = vmatpush1.msra.mxu0 %v413
    %532 = vmatprep.subr.mxu0 0.0
    %533 = vmatpush1.msra.mxu0 %v416
    %534 = vmatprep.subr.mxu0 0.0
    %535 = vmatpush1.msra.mxu0 %v419
    %536 = vmatprep.subr.mxu0 0.0
    %537 = vmatpush1.msra.mxu0 %v422
    %538 = vmatprep.subr.mxu0 0.0
    %539 = vmatpush1.msra.mxu0 %v425
    %540 = vmatprep.subr.mxu0 0.0
    %541 = vmatpush1.msra.mxu0 %v428
    %542 = vmatprep.subr.mxu0 0.0
    %543 = vmatpush1.msra.mxu0 %v431
    %544 = vmatprep.subr.mxu0 0.0
    %545 = vmatpush1.msra.mxu0 %v434
    %546 = vmatprep.subr.mxu0 0.0
    %547 = vmatpush1.msra.mxu0 %v437
    %548 = vmatprep.subr.mxu0 0.0
    %549 = vmatpush1.msra.mxu0 %v440
    %550 = vmatprep.subr.mxu0 0.0
    %551 = vmatpush1.msra.mxu0 %v443
    %552 = vmatprep.subr.mxu0 0.0
    %553 = vmatpush1.msra.mxu0 %v446
    %554 = vmatprep.subr.mxu0 0.0
    %555 = vmatpush1.msra.mxu0 %v449
    %556 = vmatprep.subr.mxu0 0.0
    %557 = vmatpush1.msra.mxu0 %v452
    %558 = vmatprep.subr.mxu0 0.0
    %559 = vmatpush1.msra.mxu0 %v455
    %560 = vmatprep.subr.mxu0 0.0
    %561 = vmatpush1.msra.mxu0 %v458
    %562 = vmatprep.subr.mxu0 0.0
    %563 = vmatpush1.msra.mxu0 0.0
    %564 = vmatprep.subr.mxu0 0.0
    %565 = vmatpush1.msra.mxu0 0.0
    %566 = vmatprep.subr.mxu0 0.0
    %567 = vmatpush1.msra.mxu0 0.0
    %568 = vmatprep.subr.mxu0 0.0
    %569 = vmatpush1.msra.mxu0 0.0
    %570 = vmatprep.subr.mxu0 0.0
    %571 = vmatpush1.msra.mxu0 0.0
    %572 = vmatprep.subr.mxu0 0.0
    %573 = vmatpush1.msra.mxu0 0.0
    %574 = vmatprep.subr.mxu0 0.0
    %575 = vmatpush1.msra.mxu0 0.0
    %576 = vmatprep.subr.mxu0 0.0
    %577 = vmatpush1.msra.mxu0 0.0
    %578 = vmatprep.subr.mxu0 0.0
    %579 = vmatpush1.msra.mxu0 0.0
    %580 = vmatprep.subr.mxu0 0.0
    %581 = vmatpush1.msra.mxu0 0.0
    %582 = vmatprep.subr.mxu0 0.0
    %583 = vmatpush1.msra.mxu0 0.0
    %584 = vmatprep.subr.mxu0 0.0
    %585 = vmatpush1.msra.mxu0 0.0
    %586 = vmatprep.subr.mxu0 0.0
    %587 = vmatpush1.msra.mxu0 0.0
    %588 = vmatprep.subr.mxu0 0.0
    %589 = vmatpush1.msra.mxu0 0.0
    %590 = vmatprep.subr.mxu0 0.0
    %591 = vmatpush1.msra.mxu0 0.0
    %592 = vmatprep.subr.mxu0 0.0
    %593 = vmatpush1.msra.mxu0 0.0
    %594 = vmatprep.mubr.f32.mxu0 0.0
    %595 = vmatmul.mubr.f32.gmra.mrb[0].mxu0 %v118
    %v596 = vpop.f32.mrb[0].mxu0
    %v597 = vadd.f32 0.0, %v596
    %v598 = vpop.f32.mrb[0].mxu0
    %599 = vdwg.mxu0
    %v600 = vadd.f32 %v337, %v526
    %v601 = vxor.u32 %v600, 2147483648
    %v602 = vmul.f32 %v601, 1.442695
    %v603 = vpow.pop %v602
    %v604 = vadd.f32 %v603, 1.0
    %v605 = vrcp.pop %v604
    %v606 = vmul.f32 1.0, %v605
    %v607 = vadd.f32 %v339, %v528
    %v608 = vxor.u32 %v607, 2147483648
    %v609 = vmul.f32 %v608, 1.442695
    %v610 = vpow.pop %v609
    %v611 = vadd.f32 %v610, 1.0
    %v612 = vrcp.pop %v611
    %v613 = vmul.f32 1.0, %v612
    %v614 = vld [vmem:[%s7] sm:$0x1]
    %v616 = vlaneseq
    %v617 = vshrl.u32 %v616, 7
    %v618 = vsub.s32 0, %v617
    %v619 = vrot.slane %v614, %v618
    %v621 = vadd.f32 %v597, %v619
    %v622 = vmul.f32 %v606, %v621
    %v623 = vadd.f32 %v408, %v622
    %v624 = vtanh.pop %v623
    %v625 = vsub.f32 1.0, %v613
    %v626 = vmul.f32 %v625, %v624
    %v627 = vmul.f32 %v613, %v118
    %v628 = vadd.f32 %v626, %v627
    %v629 = vld [vmem:[#allocation11] sm:$0xff]
    %v630 = vld [vmem:[#allocation11 + $0x8] sm:$0xff]
    %v631 = vld [vmem:[#allocation11 + $0x10] sm:$0xff]
    %v632 = vld [vmem:[#allocation11 + $0x18] sm:$0xff]
    %v633 = vld [vmem:[#allocation11 + $0x20] sm:$0xff]
    %v634 = vld [vmem:[#allocation11 + $0x28] sm:$0xff]
    %v635 = vld [vmem:[#allocation11 + $0x30] sm:$0xff]
    %v636 = vld [vmem:[#allocation11 + $0x38] sm:$0xff]
    %v637 = vld [vmem:[#allocation11 + $0x40] sm:$0xff]
    %v638 = vld [vmem:[#allocation11 + $0x48] sm:$0xff]
    %v639 = vld [vmem:[#allocation11 + $0x50] sm:$0xff]
    %v640 = vld [vmem:[#allocation11 + $0x58] sm:$0xff]
    %v641 = vld [vmem:[#allocation11 + $0x60] sm:$0xff]
    %v642 = vld [vmem:[#allocation11 + $0x68] sm:$0xff]
    %v643 = vld [vmem:[#allocation11 + $0x70] sm:$0xff]
    %v644 = vld [vmem:[#allocation11 + $0x78] sm:$0xff]
    %v645 = vld [vmem:[%s9] sm:$0x1]
    %v647 = vlaneseq
    %v648 = vshrl.u32 %v647, 7
    %v649 = vsub.s32 0, %v648
    %v650 = vrot.slane %v645, %v649
    %652 = vmatprep.subr.mxu0 0.0
    %653 = vmatpush1.msra.mxu0 %v629
    %654 = vmatprep.subr.mxu0 0.0
    %655 = vmatpush1.msra.mxu0 %v630
    %656 = vmatprep.subr.mxu0 0.0
    %657 = vmatpush1.msra.mxu0 %v631
    %658 = vmatprep.subr.mxu0 0.0
    %659 = vmatpush1.msra.mxu0 %v632
    %660 = vmatprep.subr.mxu0 0.0
    %661 = vmatpush1.msra.mxu0 %v633
    %662 = vmatprep.subr.mxu0 0.0
    %663 = vmatpush1.msra.mxu0 %v634
    %664 = vmatprep.subr.mxu0 0.0
    %665 = vmatpush1.msra.mxu0 %v635
    %666 = vmatprep.subr.mxu0 0.0
    %667 = vmatpush1.msra.mxu0 %v636
    %668 = vmatprep.subr.mxu0 0.0
    %669 = vmatpush1.msra.mxu0 %v637
    %670 = vmatprep.subr.mxu0 0.0
    %671 = vmatpush1.msra.mxu0 %v638
    %672 = vmatprep.subr.mxu0 0.0
    %673 = vmatpush1.msra.mxu0 %v639
    %674 = vmatprep.subr.mxu0 0.0
    %675 = vmatpush1.msra.mxu0 %v640
    %676 = vmatprep.subr.mxu0 0.0
    %677 = vmatpush1.msra.mxu0 %v641
    %678 = vmatprep.subr.mxu0 0.0
    %679 = vmatpush1.msra.mxu0 %v642
    %680 = vmatprep.subr.mxu0 0.0
    %681 = vmatpush1.msra.mxu0 %v643
    %682 = vmatprep.subr.mxu0 0.0
    %683 = vmatpush1.msra.mxu0 %v644
    %684 = vmatprep.subr.mxu0 0.0
    %685 = vmatpush1.msra.mxu0 0.0
    %686 = vmatprep.subr.mxu0 0.0
    %687 = vmatpush1.msra.mxu0 0.0
    %688 = vmatprep.subr.mxu0 0.0
    %689 = vmatpush1.msra.mxu0 0.0
    %690 = vmatprep.subr.mxu0 0.0
    %691 = vmatpush1.msra.mxu0 0.0
    %692 = vmatprep.subr.mxu0 0.0
    %693 = vmatpush1.msra.mxu0 0.0
    %694 = vmatprep.subr.mxu0 0.0
    %695 = vmatpush1.msra.mxu0 0.0
    %696 = vmatprep.subr.mxu0 0.0
    %697 = vmatpush1.msra.mxu0 0.0
    %698 = vmatprep.subr.mxu0 0.0
    %699 = vmatpush1.msra.mxu0 0.0
    %700 = vmatprep.subr.mxu0 0.0
    %701 = vmatpush1.msra.mxu0 0.0
    %702 = vmatprep.subr.mxu0 0.0
    %703 = vmatpush1.msra.mxu0 0.0
    %704 = vmatprep.subr.mxu0 0.0
    %705 = vmatpush1.msra.mxu0 0.0
    %706 = vmatprep.subr.mxu0 0.0
    %707 = vmatpush1.msra.mxu0 0.0
    %708 = vmatprep.subr.mxu0 0.0
    %709 = vmatpush1.msra.mxu0 0.0
    %710 = vmatprep.subr.mxu0 0.0
    %711 = vmatpush1.msra.mxu0 0.0
    %712 = vmatprep.subr.mxu0 0.0
    %713 = vmatpush1.msra.mxu0 0.0
    %714 = vmatprep.subr.mxu0 0.0
    %715 = vmatpush1.msra.mxu0 0.0
    %716 = vmatprep.mubr.f32.mxu0 0.0
    %717 = vmatmul.mubr.f32.gmra.mrb[0].mxu0 %v628
    %v718 = vpop.f32.mrb[0].mxu0
    %v719 = vadd.f32 %v650, %v718
    %v720 = vpop.f32.mrb[0].mxu0
    %721 = vdwg.mxu0
    %722 = vst [vmem:[#allocation13] sm:$0xff] %v719
    %723 = vst [vmem:[#allocation14] sm:$0xff] %v628
    // Predicated region
    $region66: #{tpu_custom_call.1} parent=1 // pred_check
      _
    $region67: #{tpu_custom_call.1} parent=1 // pred_check_branch
      %725 = sbr.rel (0) target = $region69
    $region68: #{tpu_custom_call.1} parent=1 // pred_region
      %s727 = ssub.s32 128, 128
      %728 = vsyncadd [#allocation4], %s727
      %s730 = sshll.u32 [#allocation13], 4
      %s731 = int_to_ptr.vmem [resolvable:$true] %s730
      %733 = dma.vmem_to_hbm [thread:$0]  %s731, 128, %s10, [#allocation4]
    $region69: #{tpu_custom_call.1} parent=1 // pred_fallthru
      _
    // Predicated region
    $region70: #{tpu_custom_call.1} parent=1 // pred_check
      _
    $region71: #{tpu_custom_call.1} parent=1 // pred_check_branch
      %735 = sbr.rel (0) target = $region73
    $region72: #{tpu_custom_call.1} parent=1 // pred_region
      %s737 = ssub.s32 128, 128
      %738 = vsyncadd [#allocation15], %s737
      %s740 = sshll.u32 [#allocation14], 4
      %s741 = int_to_ptr.vmem [resolvable:$true] %s740
      %743 = dma.vmem_to_hbm [thread:$0]  %s741, 128, %s11, [#allocation15]
    $region73: #{tpu_custom_call.1} parent=1 // pred_fallthru
      _
    // Predicated region
    $region74: #{tpu_custom_call.1} parent=1 // pred_check
      _
    $region75: #{tpu_custom_call.1} parent=1 // pred_check_branch
      %745 = sbr.rel (0) target = $region77
    $region76: #{tpu_custom_call.1} parent=1 // pred_region
      %746 = dma.done [#allocation4], 128
    $region77: #{tpu_custom_call.1} parent=1 // pred_fallthru
      _
    // Predicated region
    $region78: #{tpu_custom_call.1} parent=1 // pred_check
      _
    $region79: #{tpu_custom_call.1} parent=1 // pred_check_branch
      %748 = sbr.rel (0) target = $region81
    $region80: #{tpu_custom_call.1} parent=1 // pred_region
      %749 = dma.done [#allocation15], 128
    $region81: #{tpu_custom_call.1} parent=1 // pred_fallthru
      _
    %750 = vsyncpa [#allocation3], 1
    %751 = vsyncpa [#allocation6], 1
    %752 = vsyncpa [#allocation9], 1
    %753 = vsyncpa [#allocation12], 1
    %754 = vsyncpa [#allocation4], 1
    %755 = vsyncpa [#allocation15], 1

</llo_original>
